<compile_context>
chip_gen: v7x
topology: tpu7x:2x2x1
jax: 0.10.0
libtpu: 0.0.40
codegen_flags: <defaults>
</compile_context>

<pallas_src>
import jax
import jax.numpy as jnp
from jax.experimental import pallas as pl
from jax.experimental.pallas import tpu as pltpu


def _round_up(x, m):
    return ((x + m - 1) // m) * m


def _gtconv_kernel(w_ref, a_ref, o_ref):
    # w_ref : (O, C) softmax-normalized weights, resident in SMEM.
    # a_ref : (C, TM, 128) or (C, TILE) spatial block of A in VMEM.
    # o_ref : (O, TM, 128) or (O, TILE) matching output block.
    out_c, in_c = w_ref.shape
    spatial = (slice(None),) * (len(a_ref.shape) - 1)
    # Fully unrolled scalar-broadcast MACs on the VPU (O, C are tiny).
    for o in range(out_c):
        acc = w_ref[o, 0] * a_ref[(slice(0, 1),) + spatial]
        for c in range(1, in_c):
            acc = acc + w_ref[o, c] * a_ref[(slice(c, c + 1),) + spatial]
        o_ref[(slice(o, o + 1),) + spatial] = acc.astype(o_ref.dtype)


# Double-buffered (input + output) VMEM budget per grid step; comfortably under
# the default scoped-VMEM limit on every generation (v7x has 64 MiB physical).
_VMEM_BUDGET_BYTES = 16 * 1024 * 1024


def gtconv_forward(A, weight, *, tile_lanes=262144):
    """A: (in_channels, N, N); weight: (out_channels, in_channels, 1, 1)."""
    C, H, W = A.shape
    O = weight.shape[0]
    M = H * W
    if tile_lanes <= 0 or tile_lanes % 1024 != 0:
        raise ValueError("tile_lanes must be a positive multiple of 1024 "
                         "(128 lanes x 8 sublane rows).")

    # Softmax over in_channels (dim=1 of the (O, C, 1, 1) weight), done once in
    # the wrapper: O*C elements, so it is free and removes all cross-lane work
    # (XLU max/sum, EUP exp) from the streaming body.
    w_soft = jax.nn.softmax(weight.reshape(O, C).astype(jnp.float32), axis=1)

    cost = pl.CostEstimate(
        flops=2 * O * C * M,
        transcendentals=0,
        bytes_accessed=4 * (C * M + O * M) + 4 * O * C,
    )
    compiler_params = pltpu.CompilerParams(
        dimension_semantics=("parallel",),  # independent spatial tiles
    )
    w_spec = pl.BlockSpec(memory_space=pltpu.MemorySpace.SMEM)

    if M % 128 == 0:
        # Packed 3D layout (C, M/128, 128): every (8,128) VMEM tile / vreg is
        # fully occupied regardless of how small C and O are.
        m128 = M // 128
        if m128 < 8:
            tm = m128  # full-extent block is always legal
        else:
            tm_budget = max(8, (_VMEM_BUDGET_BYTES // (1024 * (C + O))) // 8 * 8)
            tm = min(tile_lanes // 128, tm_budget, _round_up(m128, 8))
            if m128 >= 16:
                # Keep >= 2 grid steps so both v7x TensorCores get tiles.
                tm = min(tm, _round_up(pl.cdiv(m128, 2), 8))
            tm = max(tm, 8)
        grid = (pl.cdiv(m128, tm),)

        out3 = pl.pallas_call(
            _gtconv_kernel,
            out_shape=jax.ShapeDtypeStruct((O, m128, 128), A.dtype),
            grid=grid,
            in_specs=[
                w_spec,                                         # (O, C) in SMEM
                pl.BlockSpec((C, tm, 128), lambda i: (0, i, 0)),
            ],
            out_specs=pl.BlockSpec((O, tm, 128), lambda i: (0, i, 0)),
            compiler_params=compiler_params,
            cost_estimate=cost,
        )(w_soft, A.reshape(C, m128, 128))
        return out3.reshape(O, H, W)

    # Ragged spatial size: lane-tiled 2D layout, no HBM padding or output slice;
    # Pallas masks the tail block.  Sublane occupancy is C/8 resp. O/8, which
    # only consumes VMEM / vector-slot slack -- the kernel stays HBM bound.
    rows = _round_up(C, 8) + _round_up(O, 8)
    tile_budget = max(128, (_VMEM_BUDGET_BYTES // (2 * 4 * rows)) // 128 * 128)
    tile = min(tile_lanes, tile_budget, _round_up(M, 128))
    if M >= 256:
        tile = min(tile, _round_up(pl.cdiv(M, 2), 128))  # >= 2 grid steps
    tile = max(tile, 128)
    grid = (pl.cdiv(M, tile),)

    out2 = pl.pallas_call(
        _gtconv_kernel,
        out_shape=jax.ShapeDtypeStruct((O, M), A.dtype),
        grid=grid,
        in_specs=[
            w_spec,                                   # (O, C) in SMEM
            pl.BlockSpec((C, tile), lambda i: (0, i)),
        ],
        out_specs=pl.BlockSpec((O, tile), lambda i: (0, i)),
        compiler_params=compiler_params,
        cost_estimate=cost,
    )(w_soft, A.reshape(C, M))
    return out2.reshape(O, H, W)


class GTConvParams:
    """Deterministic parameters + forward mirroring GTConv.__init__/reset_parameters."""

    def __init__(self, in_channels, out_channels):
        self.in_channels = in_channels
        self.out_channels = out_channels
        # nn.init.constant_(self.weight, 0.1)
        self.weight = jnp.full((out_channels, in_channels, 1, 1), 0.1, dtype=jnp.float32)
        # self.scale = nn.Parameter([0.1], requires_grad=False); unused in forward.
        self.scale = jnp.array([0.1], dtype=jnp.float32)
        # self.bias = None

    def __call__(self, A):
        return gtconv_forward(A, self.weight)


def _ref_forward(A, weight):
    # Pure-JAX reference mirroring the PyTorch forward (broadcast * softmax, sum dim=1).
    O, C = weight.shape[0], weight.shape[1]
    w_soft = jax.nn.softmax(weight.reshape(O, C), axis=1)
    return jnp.sum(A[None, :, :, :] * w_soft[:, :, None, None], axis=1)


if __name__ == "__main__":
    in_channels, out_channels = 4, 2
    module = GTConvParams(in_channels, out_channels)

    # 1) Module path: constant-0.1 weights, 128-aligned spatial (packed 3D path, grid=1).
    A1 = jax.random.normal(jax.random.PRNGKey(0), (in_channels, 16, 16), dtype=jnp.float32)
    out1 = jax.block_until_ready(module(A1))
    assert out1.shape == (out_channels, 16, 16)
    assert jnp.allclose(out1, _ref_forward(A1, module.weight), atol=1e-5, rtol=1e-5)

    # Random weights so per-(o, c) scalar indexing is genuinely exercised.
    w_rand = jax.random.normal(
        jax.random.PRNGKey(3), (out_channels, in_channels, 1, 1), dtype=jnp.float32)

    # 2) 128-aligned spatial with multiple grid steps + masked sublane tail:
    #    M = 2304 -> 18 rows of 128; tile_lanes=1024 -> TM=8 -> grid=3 (tail 2 rows).
    A2 = jax.random.normal(jax.random.PRNGKey(1), (in_channels, 48, 48), dtype=jnp.float32)
    out2 = jax.block_until_ready(gtconv_forward(A2, w_rand, tile_lanes=1024))
    assert out2.shape == (out_channels, 48, 48)
    assert jnp.allclose(out2, _ref_forward(A2, w_rand), atol=1e-5, rtol=1e-5)

    # 3) Non-128-aligned spatial (M = 1600): lane-tiled 2D path, grid=2, masked lane tail.
    A3 = jax.random.normal(jax.random.PRNGKey(2), (in_channels, 40, 40), dtype=jnp.float32)
    out3 = jax.block_until_ready(gtconv_forward(A3, w_rand, tile_lanes=1024))
    assert out3.shape == (out_channels, 40, 40)
    assert jnp.allclose(out3, _ref_forward(A3, w_rand), atol=1e-5, rtol=1e-5)

    print("KERNEL_OK")
</pallas_src>

<mosaic_0001>
module attributes {stable_mosaic.version = 11 : i64} {
  func.func @_gtconv_kernel(%arg0: i32, %arg1: memref<2x4xf32, #tpu.memory_space<smem>>, %arg2: memref<4x2x128xf32, #tpu.memory_space<vmem>>, %arg3: memref<2x2x128xf32, #tpu.memory_space<vmem>>) attributes {dimension_semantics = [#tpu.dimension_semantics<parallel>], iteration_bounds = array<i64: 1>, scalar_prefetch = 0 : i64, scratch_operands = 0 : i64, tpu.core_type = #tpu.core_type<tc>, window_params = [{transform_indices = @transform_0, window_bounds = array<i64: 2, 4>}, {transform_indices = @transform_1, window_bounds = array<i64: 4, 2, 128>}, {transform_indices = @transform_2, window_bounds = array<i64: 2, 2, 128>}]} {
    %c0 = arith.constant 0 : index
    %c0_0 = arith.constant 0 : index
    %0 = memref.load %arg1[%c0, %c0_0] : memref<2x4xf32, #tpu.memory_space<smem>>
    %c0_1 = arith.constant 0 : index
    %c0_2 = arith.constant 0 : index
    %c0_3 = arith.constant 0 : index
    %1 = vector.load %arg2[%c0_1, %c0_2, %c0_3] : memref<4x2x128xf32, #tpu.memory_space<vmem>>, vector<1x2x128xf32>
    %2 = vector.broadcast %0 : f32 to vector<1x2x128xf32>
    %3 = arith.mulf %2, %1 : vector<1x2x128xf32>
    %c0_4 = arith.constant 0 : index
    %c1 = arith.constant 1 : index
    %4 = memref.load %arg1[%c0_4, %c1] : memref<2x4xf32, #tpu.memory_space<smem>>
    %c1_5 = arith.constant 1 : index
    %c0_6 = arith.constant 0 : index
    %c0_7 = arith.constant 0 : index
    %5 = vector.load %arg2[%c1_5, %c0_6, %c0_7] : memref<4x2x128xf32, #tpu.memory_space<vmem>>, vector<1x2x128xf32>
    %6 = vector.broadcast %4 : f32 to vector<1x2x128xf32>
    %7 = arith.mulf %6, %5 : vector<1x2x128xf32>
    %8 = arith.addf %3, %7 : vector<1x2x128xf32>
    %c0_8 = arith.constant 0 : index
    %c2 = arith.constant 2 : index
    %9 = memref.load %arg1[%c0_8, %c2] : memref<2x4xf32, #tpu.memory_space<smem>>
    %c2_9 = arith.constant 2 : index
    %c0_10 = arith.constant 0 : index
    %c0_11 = arith.constant 0 : index
    %10 = vector.load %arg2[%c2_9, %c0_10, %c0_11] : memref<4x2x128xf32, #tpu.memory_space<vmem>>, vector<1x2x128xf32>
    %11 = vector.broadcast %9 : f32 to vector<1x2x128xf32>
    %12 = arith.mulf %11, %10 : vector<1x2x128xf32>
    %13 = arith.addf %8, %12 : vector<1x2x128xf32>
    %c0_12 = arith.constant 0 : index
    %c3 = arith.constant 3 : index
    %14 = memref.load %arg1[%c0_12, %c3] : memref<2x4xf32, #tpu.memory_space<smem>>
    %c3_13 = arith.constant 3 : index
    %c0_14 = arith.constant 0 : index
    %c0_15 = arith.constant 0 : index
    %15 = vector.load %arg2[%c3_13, %c0_14, %c0_15] : memref<4x2x128xf32, #tpu.memory_space<vmem>>, vector<1x2x128xf32>
    %16 = vector.broadcast %14 : f32 to vector<1x2x128xf32>
    %17 = arith.mulf %16, %15 : vector<1x2x128xf32>
    %18 = arith.addf %13, %17 : vector<1x2x128xf32>
    %c0_16 = arith.constant 0 : index
    %c0_17 = arith.constant 0 : index
    %c0_18 = arith.constant 0 : index
    %19 = vector.load %arg3[%c0_16, %c0_17, %c0_18] : memref<2x2x128xf32, #tpu.memory_space<vmem>>, vector<1x2x128xf32>
    tpu.vector_store %arg3[%c0_16, %c0_17, %c0_18], %18 {strides = array<i32>} : memref<2x2x128xf32, #tpu.memory_space<vmem>>, vector<1x2x128xf32>,
    %c1_19 = arith.constant 1 : index
    %c0_20 = arith.constant 0 : index
    %20 = memref.load %arg1[%c1_19, %c0_20] : memref<2x4xf32, #tpu.memory_space<smem>>
    %c0_21 = arith.constant 0 : index
    %c0_22 = arith.constant 0 : index
    %c0_23 = arith.constant 0 : index
    %21 = vector.load %arg2[%c0_21, %c0_22, %c0_23] : memref<4x2x128xf32, #tpu.memory_space<vmem>>, vector<1x2x128xf32>
    %22 = vector.broadcast %20 : f32 to vector<1x2x128xf32>
    %23 = arith.mulf %22, %21 : vector<1x2x128xf32>
    %c1_24 = arith.constant 1 : index
    %c1_25 = arith.constant 1 : index
    %24 = memref.load %arg1[%c1_24, %c1_25] : memref<2x4xf32, #tpu.memory_space<smem>>
    %c1_26 = arith.constant 1 : index
    %c0_27 = arith.constant 0 : index
    %c0_28 = arith.constant 0 : index
    %25 = vector.load %arg2[%c1_26, %c0_27, %c0_28] : memref<4x2x128xf32, #tpu.memory_space<vmem>>, vector<1x2x128xf32>
    %26 = vector.broadcast %24 : f32 to vector<1x2x128xf32>
    %27 = arith.mulf %26, %25 : vector<1x2x128xf32>
    %28 = arith.addf %23, %27 : vector<1x2x128xf32>
    %c1_29 = arith.constant 1 : index
    %c2_30 = arith.constant 2 : index
    %29 = memref.load %arg1[%c1_29, %c2_30] : memref<2x4xf32, #tpu.memory_space<smem>>
    %c2_31 = arith.constant 2 : index
    %c0_32 = arith.constant 0 : index
    %c0_33 = arith.constant 0 : index
    %30 = vector.load %arg2[%c2_31, %c0_32, %c0_33] : memref<4x2x128xf32, #tpu.memory_space<vmem>>, vector<1x2x128xf32>
    %31 = vector.broadcast %29 : f32 to vector<1x2x128xf32>
    %32 = arith.mulf %31, %30 : vector<1x2x128xf32>
    %33 = arith.addf %28, %32 : vector<1x2x128xf32>
    %c1_34 = arith.constant 1 : index
    %c3_35 = arith.constant 3 : index
    %34 = memref.load %arg1[%c1_34, %c3_35] : memref<2x4xf32, #tpu.memory_space<smem>>
    %c3_36 = arith.constant 3 : index
    %c0_37 = arith.constant 0 : index
    %c0_38 = arith.constant 0 : index
    %35 = vector.load %arg2[%c3_36, %c0_37, %c0_38] : memref<4x2x128xf32, #tpu.memory_space<vmem>>, vector<1x2x128xf32>
    %36 = vector.broadcast %34 : f32 to vector<1x2x128xf32>
    %37 = arith.mulf %36, %35 : vector<1x2x128xf32>
    %38 = arith.addf %33, %37 : vector<1x2x128xf32>
    %c1_39 = arith.constant 1 : index
    %c0_40 = arith.constant 0 : index
    %c0_41 = arith.constant 0 : index
    %39 = vector.load %arg3[%c1_39, %c0_40, %c0_41] : memref<2x2x128xf32, #tpu.memory_space<vmem>>, vector<1x2x128xf32>
    tpu.vector_store %arg3[%c1_39, %c0_40, %c0_41], %38 {strides = array<i32>} : memref<2x2x128xf32, #tpu.memory_space<vmem>>, vector<1x2x128xf32>,
    return
  }
  func.func @transform_0(%arg0: i32) -> (i32, i32) {
    %c0_i32 = arith.constant 0 : i32
    %c0_i32_0 = arith.constant 0 : i32
    %c0_i32_1 = arith.constant 0 : i32
    return %c0_i32, %c0_i32_0 : i32, i32
  }
  func.func @transform_1(%arg0: i32) -> (i32, i32, i32) {
    %c0_i32 = arith.constant 0 : i32
    %c0_i32_0 = arith.constant 0 : i32
    %c0_i32_1 = arith.constant 0 : i32
    return %c0_i32, %arg0, %c0_i32_0 : i32, i32, i32
  }
  func.func @transform_2(%arg0: i32) -> (i32, i32, i32) {
    %c0_i32 = arith.constant 0 : i32
    %c0_i32_0 = arith.constant 0 : i32
    %c0_i32_1 = arith.constant 0 : i32
    return %c0_i32, %arg0, %c0_i32_0 : i32, i32, i32
  }
}

</mosaic_0001>

<llo_original>
// kernel: tpu_custom_call.1
$region0: #{tpu_custom_call.1}
  #allocation0 [shape = 'u32[]', space=smem, size = 0x4, offset = 0x4, fixed_abs, tag = 'smem constant byte address 0x4 - core index']
  #allocation1 [shape = 'u32[144,128]{1,0:T(1,128)}', space=vmem, size = 0x12000, scoped, tag = 'internal scratch']
  %s0 = inlined_call_operand.hbm [shape: f32[2,4], index: 0, kind: input, shape index: {}]
  %s1 = inlined_call_operand.hbm [shape: f32[4,2,128], index: 1, kind: input, shape index: {}]
  %s2 = inlined_call_operand.hbm [shape: f32[2,2,128], index: 2, kind: output, shape index: {}]
  %s3 = sld [smem:[#allocation0]]
  $region26: #{tpu_custom_call.1} parent=0
    _
  %s5 = ssub.s32 1, %s3
  %s6 = scalar_select 0, %s5, %s3
  $region1: #{tpu_custom_call.1} parent=0
    #allocation2 [shape = 'u8[1024]{0}', space=smem, size = 0x400, scoped, tag = 'input window, operand 0, single buffered']
    #allocation3 [shape = 's32[1]{0}', space=sflag, size = 0x4, scoped, tag = 'scoped memory for tpu_custom_call.1']
    #allocation4 [shape = 's32[1]{0}', space=sflag, size = 0x4, scoped, tag = 'scoped memory for tpu_custom_call.1']
    #allocation5 [shape = 's32[1]{0}', space=sflag, size = 0x4, scoped, tag = 'scoped memory for tpu_custom_call.1']
    #allocation6 [shape = 'u8[4096]{0}', space=vmem, size = 0x1000, scoped, tag = 'input window, operand 1, single buffered']
    #allocation7 [shape = 'u8[2048]{0}', space=vmem, size = 0x800, scoped, tag = 'output window, operand 0, single buffered']
    %7 = vsyncpa [#allocation5], 0
    %8 = vsyncpa [#allocation3], 0
    %9 = vsyncpa [#allocation4], 0
    // Predicated region
    $region2: #{tpu_custom_call.1} parent=1 // pred_check
      _
    $region3: #{tpu_custom_call.1} parent=1 // pred_check_branch
      %11 = sbr.rel (0) target = $region5
    $region4: #{tpu_custom_call.1} parent=1 // pred_region
      %s13 = ssub.s32 32, 32
      %14 = vsyncadd [#allocation5], %s13
      %17 = dma.hbm_to_smem %s0, 32, [#allocation2], [#allocation5]
    $region5: #{tpu_custom_call.1} parent=1 // pred_fallthru
      _
    // Predicated region
    $region6: #{tpu_custom_call.1} parent=1 // pred_check
      _
    $region7: #{tpu_custom_call.1} parent=1 // pred_check_branch
      %19 = sbr.rel (0) target = $region9
    $region8: #{tpu_custom_call.1} parent=1 // pred_region
      %s21 = ssub.s32 128, 128
      %22 = vsyncadd [#allocation3], %s21
      %s23 = sshll.u32 [#allocation6], 4
      %s24 = int_to_ptr.vmem [resolvable:$true] %s23
      %29 = dma.hbm_to_vmem [thread:$0]  %s1, 128, %s24, [#allocation3], 32, 32, 2
    $region9: #{tpu_custom_call.1} parent=1 // pred_fallthru
      _
    // Predicated region
    $region10: #{tpu_custom_call.1} parent=1 // pred_check
      _
    $region11: #{tpu_custom_call.1} parent=1 // pred_check_branch
      %31 = sbr.rel (0) target = $region13
    $region12: #{tpu_custom_call.1} parent=1 // pred_region
      %32 = dma.done [#allocation5], 32
    $region13: #{tpu_custom_call.1} parent=1 // pred_fallthru
      _
    // Predicated region
    $region14: #{tpu_custom_call.1} parent=1 // pred_check
      _
    $region15: #{tpu_custom_call.1} parent=1 // pred_check_branch
      %34 = sbr.rel (0) target = $region17
    $region16: #{tpu_custom_call.1} parent=1 // pred_region
      %35 = dma.done [#allocation3], 128
    $region17: #{tpu_custom_call.1} parent=1 // pred_fallthru
      _
    %36 = sfence
    %s37 = sld [smem:[#allocation2]]
    %v38 = vld [vmem:[#allocation6] sm:$0x3]
    %v39 = vstv %s37
    %v40 = vmul.f32 %v39, %v38
    %s41 = sld [smem:[#allocation2 + $0x1]]
    %s42 = scalar_lea.vmem [#allocation6], 2
    %v43 = vld [vmem:[%s42] sm:$0x3]
    %v44 = vstv %s41
    %v45 = vmul.f32 %v44, %v43
    %v46 = vadd.f32 %v40, %v45
    %s47 = sld [smem:[#allocation2 + $0x2]]
    %s48 = scalar_lea.vmem [#allocation6], 4
    %v49 = vld [vmem:[%s48] sm:$0x3]
    %v50 = vstv %s47
    %v51 = vmul.f32 %v50, %v49
    %v52 = vadd.f32 %v46, %v51
    %s53 = sld [smem:[#allocation2 + $0x3]]
    %s54 = scalar_lea.vmem [#allocation6], 6
    %v55 = vld [vmem:[%s54] sm:$0x3]
    %v56 = vstv %s53
    %v57 = vmul.f32 %v56, %v55
    %v58 = vadd.f32 %v52, %v57
    %59 = vst [vmem:[#allocation7] sm:$0x3] %v58
    %s60 = sld [smem:[#allocation2 + $0x80]]
    %v61 = vld [vmem:[#allocation6] sm:$0x3]
    %v62 = vstv %s60
    %v63 = vmul.f32 %v62, %v61
    %s64 = sld [smem:[#allocation2 + $0x81]]
    %v65 = vld [vmem:[%s42] sm:$0x3]
    %v66 = vstv %s64
    %v67 = vmul.f32 %v66, %v65
    %v68 = vadd.f32 %v63, %v67
    %s69 = sld [smem:[#allocation2 + $0x82]]
    %v70 = vld [vmem:[%s48] sm:$0x3]
    %v71 = vstv %s69
    %v72 = vmul.f32 %v71, %v70
    %v73 = vadd.f32 %v68, %v72
    %s74 = sld [smem:[#allocation2 + $0x83]]
    %v75 = vld [vmem:[%s54] sm:$0x3]
    %v76 = vstv %s74
    %v77 = vmul.f32 %v76, %v75
    %v78 = vadd.f32 %v73, %v77
    %s79 = scalar_lea.vmem [#allocation7], 2
    %80 = vst [vmem:[%s79] sm:$0x3] %v78
    // Predicated region
    $region18: #{tpu_custom_call.1} parent=1 // pred_check
      _
    $region19: #{tpu_custom_call.1} parent=1 // pred_check_branch
      %82 = sbr.rel (0) target = $region21
    $region20: #{tpu_custom_call.1} parent=1 // pred_region
      %s84 = ssub.s32 64, 64
      %85 = vsyncadd [#allocation4], %s84
      %s86 = sshll.u32 [#allocation7], 4
      %s87 = int_to_ptr.vmem [resolvable:$true] %s86
      %92 = dma.vmem_to_hbm [thread:$0]  %s87, 64, %s2, [#allocation4], 32, 32, 2
    $region21: #{tpu_custom_call.1} parent=1 // pred_fallthru
      _
    // Predicated region
    $region22: #{tpu_custom_call.1} parent=1 // pred_check
      _
    $region23: #{tpu_custom_call.1} parent=1 // pred_check_branch
      %94 = sbr.rel (0) target = $region25
    $region24: #{tpu_custom_call.1} parent=1 // pred_region
      %95 = dma.done [#allocation4], 64
    $region25: #{tpu_custom_call.1} parent=1 // pred_fallthru
      _
    %96 = vsyncpa [#allocation3], 1
    %97 = vsyncpa [#allocation4], 1
    %98 = vsyncpa [#allocation5], 1

</llo_original>
